<compile_context>
chip_gen: v7x
topology: tpu7x:2x2x1
jax: 0.10.0
libtpu: 0.0.40
codegen_flags: <defaults>
</compile_context>

<pallas_src>
import functools

import jax
import jax.numpy as jnp
from jax.experimental import pallas as pl
from jax.experimental.pallas import tpu as pltpu

_TM_MAX = 256
_TK_MAX = 1024
_TN_MAX = 1024
# Conservative resident-path VMEM budget: fits the 32 MiB scoped default on every
# generation (v7x physical VMEM is 64 MiB).
_RESIDENT_VMEM_BUDGET = 24 * 1024 * 1024


def _round_up(x, m):
    return ((x + m - 1) // m) * m


def _divisor_tile(dim_padded, cap):
    """Largest multiple of 128 <= cap that divides dim_padded (dim_padded % 128 == 0)."""
    t = min(cap, dim_padded)
    t = (t // 128) * 128
    while t > 128 and dim_padded % t != 0:
        t -= 128
    return max(t, 128)


def _linear_resident_kernel(x_ref, w_ref, b_ref, o_ref):
    # Full-K dot in one step: no accumulator, no pl.when, bias added exactly once.
    o_ref[...] = (
        jnp.dot(x_ref[...], w_ref[...], preferred_element_type=jnp.float32)
        + b_ref[...]
    ).astype(o_ref.dtype)


def _linear_stream_kernel(x_ref, w_ref, b_ref, o_ref):
    # Output block index is k-invariant -> the f32 output tile stays VMEM-resident
    # across the K axis; accumulate into it directly (no separate acc scratch).
    k = pl.program_id(2)

    @pl.when(k == 0)
    def _():
        o_ref[...] = jnp.zeros_like(o_ref)

    o_ref[...] += jnp.dot(x_ref[...], w_ref[...], preferred_element_type=jnp.float32)

    @pl.when(k == pl.num_programs(2) - 1)
    def _():
        o_ref[...] += b_ref[...]


@functools.partial(jax.jit, static_argnames=("d_out",))
def _linear_forward_padded(x_flat, w_p, b_p, d_out):
    """x_flat: (B, d_in) f32.  w_p: (Kp, Np) bf16 pre-padded.  b_p: (1, Np) f32 pre-padded."""
    B, d_in = x_flat.shape
    Kp, Np = w_p.shape

    # M padded to a 16-row multiple (clean bf16 sublane packing on v5e), tile capped.
    tm = min(_TM_MAX, _round_up(B, 16))
    Mp = _round_up(B, tm)
    x_pad = jnp.pad(x_flat, ((0, Mp - B), (0, Kp - d_in))).astype(jnp.bfloat16)

    tn = _divisor_tile(Np, _TN_MAX)
    mb, nb = Mp // tm, Np // tn

    # v7x megacore: guarantee a parallel axis with >= 2 blocks when shapes allow it.
    if mb == 1 and nb == 1 and Np >= 256:
        tn = _divisor_tile(Np, Np // 2)
        nb = Np // tn

    cost = pl.CostEstimate(
        flops=2 * Mp * Kp * Np,
        transcendentals=0,
        bytes_accessed=Mp * Kp * 2 + Kp * Np * 2 + Np * 4 + Mp * Np * 4,
    )

    # Double-buffered working set of the resident path.
    resident_vmem = (
        2 * tm * Kp * 2 + 2 * Kp * tn * 2 + 2 * tm * tn * 4 + 2 * tn * 4
    )

    if resident_vmem <= _RESIDENT_VMEM_BUDGET:
        # Weight-resident path: no K grid axis, full-K dot per step.  Grid ordered
        # (N-blocks, M-blocks) so the inner M loop keeps the same W block index
        # (no re-DMA) -> W streamed from HBM exactly once.
        y_pad = pl.pallas_call(
            _linear_resident_kernel,
            out_shape=jax.ShapeDtypeStruct((Mp, Np), jnp.float32),
            grid=(nb, mb),
            in_specs=[
                pl.BlockSpec((tm, Kp), lambda j, i: (i, 0)),
                pl.BlockSpec((Kp, tn), lambda j, i: (0, j)),
                pl.BlockSpec((1, tn), lambda j, i: (0, j)),
            ],
            out_specs=pl.BlockSpec((tm, tn), lambda j, i: (i, j)),
            compiler_params=pltpu.CompilerParams(
                dimension_semantics=("parallel", "parallel"),
                vmem_limit_bytes=32 * 1024 * 1024,
            ),
            cost_estimate=cost,
        )(x_pad, w_p, b_p)
    else:
        # Streaming fallback for large weights: tiled MNK grid, K (reduction) last and
        # "arbitrary", accumulate directly into the resident f32 output block, weight
        # stream triple-buffered.
        tk = _divisor_tile(Kp, _TK_MAX)
        kb = Kp // tk
        y_pad = pl.pallas_call(
            _linear_stream_kernel,
            out_shape=jax.ShapeDtypeStruct((Mp, Np), jnp.float32),
            grid=(mb, nb, kb),
            in_specs=[
                pl.BlockSpec((tm, tk), lambda i, j, k: (i, k)),
                pl.BlockSpec(
                    (tk, tn), lambda i, j, k: (k, j), pipeline_mode=pl.Buffered(3)
                ),
                pl.BlockSpec((1, tn), lambda i, j, k: (0, j)),
            ],
            out_specs=pl.BlockSpec((tm, tn), lambda i, j, k: (i, j)),
            compiler_params=pltpu.CompilerParams(
                dimension_semantics=("parallel", "parallel", "arbitrary"),
                vmem_limit_bytes=48 * 1024 * 1024,
            ),
            cost_estimate=cost,
        )(x_pad, w_p, b_p)

    if Mp == B and Np == d_out:
        return y_pad
    return y_pad[:B, :d_out]


class BaseModelPallas:
    """Pallas analogue of BaseModel(n_features, n_landmarks, obs_length, pred_length)."""

    def __init__(self, n_features, n_landmarks, obs_length, pred_length, key):
        self.n_features = n_features
        self.n_landmarks = n_landmarks
        self.obs_length = obs_length
        self.pred_length = pred_length
        self.total_length = obs_length + pred_length

        self.d_in = obs_length * n_landmarks * n_features
        self.d_out = pred_length * n_landmarks * n_features

        kw, kb = jax.random.split(key)
        w_f32 = jax.random.normal(kw, (self.d_in, self.d_out), jnp.float32) * (
            1.0 / jnp.sqrt(jnp.float32(self.d_in))
        )
        b_f32 = jax.random.normal(kb, (self.d_out,), jnp.float32) * 0.01

        # Unpadded copies (parameter count / reference checks).
        self.w = w_f32.astype(jnp.bfloat16)
        self.b = b_f32

        # Pad + cast ONCE here (hoisted out of the per-call path): the forward is
        # weight-bandwidth bound, so re-padding W in HBM every call would roughly
        # double its HBM traffic.
        kp = _round_up(self.d_in, 128)
        np_ = _round_up(self.d_out, 128)
        self.w_padded = jnp.pad(
            self.w, ((0, kp - self.d_in), (0, np_ - self.d_out))
        )
        self.b_padded = jnp.pad(b_f32, ((0, np_ - self.d_out),)).reshape(1, np_)

    def get_params(self):
        return self.w.size + self.b.size

    def __call__(self, x_obs):
        B = x_obs.shape[0]
        x_flat = x_obs.reshape(B, self.d_in)
        y_flat = _linear_forward_padded(
            x_flat, self.w_padded, self.b_padded, self.d_out
        )
        return y_flat.reshape(B, self.pred_length, self.n_landmarks, self.n_features)


if __name__ == "__main__":
    key = jax.random.PRNGKey(0)
    k_model, k_data = jax.random.split(key)

    n_features = 2
    n_landmarks = 4
    obs_length = 8
    pred_length = 4
    batch = 2

    model = BaseModelPallas(n_features, n_landmarks, obs_length, pred_length, k_model)

    x_obs = jax.random.normal(
        k_data, (batch, obs_length, n_landmarks, n_features), jnp.float32
    )

    y = model(x_obs)
    y = jax.block_until_ready(y)

    # Sanity check against a pure-JAX reference (same bf16 inputs, f32 accumulation).
    d_in = obs_length * n_landmarks * n_features
    x_bf = x_obs.reshape(batch, d_in).astype(jnp.bfloat16).astype(jnp.float32)
    w_f = model.w.astype(jnp.float32)
    y_ref = (x_bf @ w_f + model.b).reshape(
        batch, pred_length, n_landmarks, n_features
    )

    assert y.shape == (batch, pred_length, n_landmarks, n_features)
    assert jnp.allclose(y, y_ref, atol=1e-2, rtol=1e-2)

    print("KERNEL_OK")
</pallas_src>

<mosaic_0001>
module attributes {stable_mosaic.version = 11 : i64} {
  func.func @_linear_resident_kernel(%arg0: i32, %arg1: i32, %arg2: memref<16x128xbf16, #tpu.memory_space<vmem>>, %arg3: memref<128x128xbf16, #tpu.memory_space<vmem>>, %arg4: memref<1x128xf32, #tpu.memory_space<vmem>>, %arg5: memref<16x128xf32, #tpu.memory_space<vmem>>) attributes {dimension_semantics = [#tpu.dimension_semantics<parallel>, #tpu.dimension_semantics<parallel>], iteration_bounds = array<i64: 1, 1>, scalar_prefetch = 0 : i64, scratch_operands = 0 : i64, tpu.core_type = #tpu.core_type<tc>, window_params = [{transform_indices = @transform_0, window_bounds = array<i64: 16, 128>}, {transform_indices = @transform_1, window_bounds = array<i64: 128, 128>}, {transform_indices = @transform_2, window_bounds = array<i64: 1, 128>}, {transform_indices = @transform_3, window_bounds = array<i64: 16, 128>}]} {
    %c0 = arith.constant 0 : index
    %c0_0 = arith.constant 0 : index
    %0 = vector.load %arg2[%c0, %c0_0] : memref<16x128xbf16, #tpu.memory_space<vmem>>, vector<16x128xbf16>
    %c0_1 = arith.constant 0 : index
    %c0_2 = arith.constant 0 : index
    %1 = vector.load %arg3[%c0_1, %c0_2] : memref<128x128xbf16, #tpu.memory_space<vmem>>, vector<128x128xbf16>
    %cst = arith.constant dense<0.000000e+00> : vector<16x128xf32>
    %2 = tpu.matmul %0, %1, %cst {dimension_numbers = #tpu.dot_dimension_numbers<[1], [0], [0], [1], [0, 0, 1, 1], [], []>} : vector<16x128xbf16>, vector<128x128xbf16>, vector<16x128xf32> -> vector<16x128xf32>
    %c0_3 = arith.constant 0 : index
    %c0_4 = arith.constant 0 : index
    %3 = vector.load %arg4[%c0_3, %c0_4] : memref<1x128xf32, #tpu.memory_space<vmem>>, vector<1x128xf32>
    %4 = vector.broadcast %3 : vector<1x128xf32> to vector<16x128xf32>
    %5 = arith.addf %2, %4 : vector<16x128xf32>
    %c0_5 = arith.constant 0 : index
    %c0_6 = arith.constant 0 : index
    %6 = vector.load %arg5[%c0_5, %c0_6] : memref<16x128xf32, #tpu.memory_space<vmem>>, vector<16x128xf32>
    tpu.vector_store %arg5[%c0_5, %c0_6], %5 {strides = array<i32>} : memref<16x128xf32, #tpu.memory_space<vmem>>, vector<16x128xf32>,
    return
  }
  func.func @transform_0(%arg0: i32, %arg1: i32) -> (i32, i32) {
    %c0_i32 = arith.constant 0 : i32
    %c0_i32_0 = arith.constant 0 : i32
    return %arg1, %c0_i32 : i32, i32
  }
  func.func @transform_1(%arg0: i32, %arg1: i32) -> (i32, i32) {
    %c0_i32 = arith.constant 0 : i32
    %c0_i32_0 = arith.constant 0 : i32
    return %c0_i32, %arg0 : i32, i32
  }
  func.func @transform_2(%arg0: i32, %arg1: i32) -> (i32, i32) {
    %c0_i32 = arith.constant 0 : i32
    %c0_i32_0 = arith.constant 0 : i32
    return %c0_i32, %arg0 : i32, i32
  }
  func.func @transform_3(%arg0: i32, %arg1: i32) -> (i32, i32) {
    %c0_i32 = arith.constant 0 : i32
    return %arg1, %arg0 : i32, i32
  }
}

</mosaic_0001>

<llo_original>
// kernel: _linear_forward_padded.1
$region0: #{_linear_forward_padded.1}
  #allocation0 [shape = 'u32[]', space=smem, size = 0x4, offset = 0x4, fixed_abs, tag = 'smem constant byte address 0x4 - core index']
  #allocation1 [shape = 'u32[144,128]{1,0:T(1,128)}', space=vmem, size = 0x12000, scoped, tag = 'internal scratch']
  %s0 = inlined_call_operand.vmem [shape: bf16[16,128], index: 0, kind: input, shape index: {}]
  %s1 = inlined_call_operand.hbm [shape: bf16[128,128], index: 1, kind: input, shape index: {}]
  %s2 = inlined_call_operand.vmem [shape: f32[1,128], index: 2, kind: input, shape index: {}]
  %s3 = inlined_call_operand.vmem [shape: f32[16,128], index: 3, kind: output, shape index: {}]
  %s4 = sld [smem:[#allocation0]]
  $region26: #{_linear_forward_padded.1} parent=0
    _
  %s6 = ssub.s32 1, %s4
  %s7 = scalar_select 0, %s6, %s4
  $region1: #{_linear_forward_padded.1} parent=0
    #allocation2 [shape = 'u8[32768]{0}', space=vmem, size = 0x8000, scoped, tag = 'input window, operand 1, single buffered']
    #allocation3 [shape = 's32[1]{0}', space=sflag, size = 0x4, scoped, tag = 'scoped memory for _linear_forward_padded.1']
    %8 = vsyncpa [#allocation3], 0
    // Predicated region
    $region2: #{_linear_forward_padded.1} parent=1 // pred_check
      _
    $region3: #{_linear_forward_padded.1} parent=1 // pred_check_branch
      %10 = sbr.rel (0) target = $region5
    $region4: #{_linear_forward_padded.1} parent=1 // pred_region
      _
    $region5: #{_linear_forward_padded.1} parent=1 // pred_fallthru
      _
    // Predicated region
    $region6: #{_linear_forward_padded.1} parent=1 // pred_check
      _
    $region7: #{_linear_forward_padded.1} parent=1 // pred_check_branch
      %12 = sbr.rel (0) target = $region9
    $region8: #{_linear_forward_padded.1} parent=1 // pred_region
      %s14 = ssub.s32 1024, 1024
      %15 = vsyncadd [#allocation3], %s14
      %s16 = sshll.u32 [#allocation2], 4
      %s17 = int_to_ptr.vmem [resolvable:$true] %s16
      %22 = dma.hbm_to_vmem [thread:$0]  %s1, 1024, %s17, [#allocation3], 64, 64, 4
    $region9: #{_linear_forward_padded.1} parent=1 // pred_fallthru
      _
    // Predicated region
    $region10: #{_linear_forward_padded.1} parent=1 // pred_check
      _
    $region11: #{_linear_forward_padded.1} parent=1 // pred_check_branch
      %24 = sbr.rel (0) target = $region13
    $region12: #{_linear_forward_padded.1} parent=1 // pred_region
      _
    $region13: #{_linear_forward_padded.1} parent=1 // pred_fallthru
      _
    // Predicated region
    $region14: #{_linear_forward_padded.1} parent=1 // pred_check
      _
    $region15: #{_linear_forward_padded.1} parent=1 // pred_check_branch
      %26 = sbr.rel (0) target = $region17
    $region16: #{_linear_forward_padded.1} parent=1 // pred_region
      %27 = dma.done [#allocation3], 1024
    $region17: #{_linear_forward_padded.1} parent=1 // pred_fallthru
      _
    %v29 = vld [vmem:[%s0] sm:$0xf]
    %v30 = vld [vmem:[%s0 + $0x4] sm:$0xf]
    %v31 = vld [vmem:[#allocation2] sm:$0xf]
    %v32 = vld [vmem:[#allocation2 + $0x4] sm:$0xf]
    %v33 = vld [vmem:[#allocation2 + $0x8] sm:$0xf]
    %v34 = vld [vmem:[#allocation2 + $0xc] sm:$0xf]
    %v35 = vld [vmem:[#allocation2 + $0x10] sm:$0xf]
    %v36 = vld [vmem:[#allocation2 + $0x14] sm:$0xf]
    %v37 = vld [vmem:[#allocation2 + $0x18] sm:$0xf]
    %v38 = vld [vmem:[#allocation2 + $0x1c] sm:$0xf]
    %v39 = vld [vmem:[#allocation2 + $0x20] sm:$0xf]
    %v40 = vld [vmem:[#allocation2 + $0x24] sm:$0xf]
    %v41 = vld [vmem:[#allocation2 + $0x28] sm:$0xf]
    %v42 = vld [vmem:[#allocation2 + $0x2c] sm:$0xf]
    %v43 = vld [vmem:[#allocation2 + $0x30] sm:$0xf]
    %v44 = vld [vmem:[#allocation2 + $0x34] sm:$0xf]
    %v45 = vld [vmem:[#allocation2 + $0x38] sm:$0xf]
    %v46 = vld [vmem:[#allocation2 + $0x3c] sm:$0xf]
    %v47 = vld [vmem:[%s2] sm:$0x1]
    %v49 = vlaneseq
    %v50 = vshrl.u32 %v49, 7
    %v51 = vsub.s32 0, %v50
    %v52 = vrot.slane %v47, %v51
    %v56 = vunpack.c.l.b16 %v29
    %v57 = vunpack.c.l.b16 %v30
    %v58 = vpack.c.b16 %v57, %v56
    %v76 = vunpack.c.l.b16 %v31
    %v77 = vunpack.c.l.b16 %v32
    %v78 = vunpack.c.l.b16 %v33
    %v79 = vunpack.c.l.b16 %v34
    %v80 = vunpack.c.l.b16 %v35
    %v81 = vunpack.c.l.b16 %v36
    %v82 = vunpack.c.l.b16 %v37
    %v83 = vunpack.c.l.b16 %v38
    %v84 = vunpack.c.l.b16 %v39
    %v85 = vunpack.c.l.b16 %v40
    %v86 = vunpack.c.l.b16 %v41
    %v87 = vunpack.c.l.b16 %v42
    %v88 = vunpack.c.l.b16 %v43
    %v89 = vunpack.c.l.b16 %v44
    %v90 = vunpack.c.l.b16 %v45
    %v91 = vunpack.c.l.b16 %v46
    %v92 = vpack.c.b16 %v77, %v76
    %v93 = vpack.c.b16 %v79, %v78
    %v94 = vpack.c.b16 %v81, %v80
    %v95 = vpack.c.b16 %v83, %v82
    %v96 = vpack.c.b16 %v85, %v84
    %v97 = vpack.c.b16 %v87, %v86
    %v98 = vpack.c.b16 %v89, %v88
    %v99 = vpack.c.b16 %v91, %v90
    %108 = vmatprep.subr.bf16.mxu0 0
    %109 = vmatpush1.bf16.msra.mxu0 %v92
    %110 = vmatprep.subr.bf16.mxu0 0
    %111 = vmatpush1.bf16.msra.mxu0 %v93
    %112 = vmatprep.subr.bf16.mxu0 0
    %113 = vmatpush1.bf16.msra.mxu0 %v94
    %114 = vmatprep.subr.bf16.mxu0 0
    %115 = vmatpush1.bf16.msra.mxu0 %v95
    %116 = vmatprep.subr.bf16.mxu0 0
    %117 = vmatpush1.bf16.msra.mxu0 %v96
    %118 = vmatprep.subr.bf16.mxu0 0
    %119 = vmatpush1.bf16.msra.mxu0 %v97
    %120 = vmatprep.subr.bf16.mxu0 0
    %121 = vmatpush1.bf16.msra.mxu0 %v98
    %122 = vmatprep.subr.bf16.mxu0 0
    %123 = vmatpush1.bf16.msra.mxu0 %v99
    %124 = vmatprep.subr.bf16.mxu0 0
    %125 = vmatpush1.bf16.msra.mxu0 0
    %126 = vmatprep.subr.bf16.mxu0 0
    %127 = vmatpush1.bf16.msra.mxu0 0
    %128 = vmatprep.subr.bf16.mxu0 0
    %129 = vmatpush1.bf16.msra.mxu0 0
    %130 = vmatprep.subr.bf16.mxu0 0
    %131 = vmatpush1.bf16.msra.mxu0 0
    %132 = vmatprep.subr.bf16.mxu0 0
    %133 = vmatpush1.bf16.msra.mxu0 0
    %134 = vmatprep.subr.bf16.mxu0 0
    %135 = vmatpush1.bf16.msra.mxu0 0
    %136 = vmatprep.subr.bf16.mxu0 0
    %137 = vmatpush1.bf16.msra.mxu0 0
    %138 = vmatprep.subr.bf16.mxu0 0
    %139 = vmatpush1.bf16.msra.mxu0 0
    %140 = vmatprep.mubr.bf16.mxu0 0
    %141 = vmatmul.mubr.bf16.gmra.mrb[0].mxu0 %v58
    %v142 = vpop.f32.mrb[0].mxu0
    %v143 = vadd.f32 %v52, %v142
    %v144 = vpop.f32.mrb[0].mxu0
    %v145 = vpop.f32.mrb[0].mxu0
    %v146 = vadd.f32 %v52, %v145
    %v147 = vpop.f32.mrb[0].mxu0
    %148 = vdwg.mxu0
    %149 = vst [vmem:[%s3] sm:$0xff] %v143
    %150 = vst [vmem:[%s3 + $0x8] sm:$0xff] %v146
    // Predicated region
    $region18: #{_linear_forward_padded.1} parent=1 // pred_check
      _
    $region19: #{_linear_forward_padded.1} parent=1 // pred_check_branch
      %152 = sbr.rel (0) target = $region21
    $region20: #{_linear_forward_padded.1} parent=1 // pred_region
      _
    $region21: #{_linear_forward_padded.1} parent=1 // pred_fallthru
      _
    // Predicated region
    $region22: #{_linear_forward_padded.1} parent=1 // pred_check
      _
    $region23: #{_linear_forward_padded.1} parent=1 // pred_check_branch
      %154 = sbr.rel (0) target = $region25
    $region24: #{_linear_forward_padded.1} parent=1 // pred_region
      _
    $region25: #{_linear_forward_padded.1} parent=1 // pred_fallthru
      _
    %155 = vsyncpa [#allocation3], 1

</llo_original>
